<compile_context>
chip_gen: v5e
topology: v5e:2x2
jax: 0.10.0
libtpu: 0.0.40
codegen_flags: <defaults>
</compile_context>

<pallas_src>
import functools

import jax
import jax.numpy as jnp
from jax.experimental import pallas as pl
from jax.experimental.pallas import tpu as pltpu


def _gln_interleave_kernel(x_ref, o_ref, *, n_classes):
    """General path: o[b, f*C + c] = sigmoid(x[b, f]) (lane-dense 2D output).

    x_ref: (TB, FT) input tile.  o_ref: (TB, FT * n_classes) output tile.
    Sigmoid + dtype cast happen on the small tile BEFORE the C-fold broadcast.
    Padded rows/cols of partial edge blocks are computed on garbage values and
    clipped by Pallas on the bounded output write (harmless).
    """
    x = x_ref[...].astype(jnp.float32)
    s = (1.0 / (1.0 + jnp.exp(-x))).astype(o_ref.dtype)      # exact sigmoid
    tb, ft = s.shape
    o_ref[...] = jnp.broadcast_to(
        s[:, :, None], (tb, ft, n_classes)).reshape(tb, ft * n_classes)


def _gln_lane_kernel(x_ref, o_ref):
    """Lane-dense class axis (C % 128 == 0): o[b, f, c] = sigmoid(x[b, f]).

    The class axis is the (128-aligned) lane axis of the 3D output block, so
    the broadcast is a plain lane splat — no interleave relayout.
    """
    x = x_ref[...].astype(jnp.float32)
    s = (1.0 / (1.0 + jnp.exp(-x))).astype(o_ref.dtype)      # cast on small tile
    o_ref[...] = jnp.broadcast_to(s[:, :, None], o_ref.shape)


def base_gln_forward(x: jax.Array, n_classes: int, *, out_dtype=None,
                     target_block_bytes: int = 8 * 1024 * 1024) -> jax.Array:
    """Pallas implementation of BaseGLN.forward with an empty layer stack.

    Returns sigmoid(x) broadcast over a trailing class axis: (B, F, n_classes).
    `out_dtype=jnp.bfloat16` halves the HBM write traffic (biggest lever for
    this write-bound op) when the consumer tolerates it.
    """
    B, F = x.shape
    C = int(n_classes)
    out_dtype = x.dtype if out_dtype is None else jnp.dtype(out_dtype)
    itemsize = jnp.dtype(out_dtype).itemsize

    # ---- Generation-aware VMEM limit with headroom for Mosaic scratch -------
    try:
        phys_vmem = int(pltpu.get_tpu_info().vmem_capacity_bytes)
    except Exception:  # pragma: no cover - conservative fallback (v7x per-TC)
        phys_vmem = 64 * 1024 * 1024
    vmem_limit = max(32 * 1024 * 1024, min(48 * 1024 * 1024, phys_vmem // 2))

    # Output-block byte target: default ~8 MiB (double-buffered out blocks plus
    # the tiny double-buffered input stay well under vmem_limit).  The knob is
    # exposed mainly so tests can force the tiled paths at small shapes.
    block_budget = min(max(int(target_block_bytes), 1), vmem_limit // 3)

    # Row (batch) tile: multiple of the sublane alignment of out_dtype, or the
    # full batch extent (exempt from the (8,128) rule).
    sublane_align = max(8, 32 // max(itemsize, 1))        # 8 f32, 16 bf16
    out_row_bytes = F * C * itemsize
    rows_for_budget = max(1, block_budget // max(out_row_bytes, 1))
    if rows_for_budget >= B:
        tb = B
    else:
        tb = min(B, max(sublane_align,
                        (rows_for_budget // sublane_align) * sublane_align))
    need_col_tiling = tb * out_row_bytes > block_budget
    nb = pl.cdiv(B, tb)

    compiler_params = pltpu.CompilerParams(
        # NOTE(v7x): both grid axes are independent -> "parallel" lets Mosaic
        # shard them across the two TensorCores; if xprof shows one TC idle,
        # switch to CORE_PARALLEL / core_map over a leading axis.
        dimension_semantics=("parallel", "parallel"),
        vmem_limit_bytes=vmem_limit,
    )

    if C % 128 == 0:
        # ---- 3D lane-dense path: no interleave relayout ----------------------
        if need_col_tiling:
            ct = (block_budget // max(tb * F * itemsize, 1)) // 128 * 128
            ct = min(C, max(128, ct))
        else:
            ct = C
        nc = pl.cdiv(C, ct)
        return pl.pallas_call(
            _gln_lane_kernel,
            out_shape=jax.ShapeDtypeStruct((B, F, C), out_dtype),
            grid=(nb, nc),
            in_specs=[pl.BlockSpec((tb, F), lambda i, j: (i, 0))],
            out_specs=pl.BlockSpec((tb, F, ct), lambda i, j: (i, 0, j)),
            compiler_params=compiler_params,
        )(x)

    # ---- General path: lane-dense 2D (B, F*C) output, free reshape after ----
    if need_col_tiling and F > 128:
        # Tile the feature axis in 128-lane chunks so both the (tb, ft) input
        # tile and the (tb, ft*C) output tile stay 128-aligned (unmasked vst).
        ft = (block_budget // max(tb * C * itemsize, 1)) // 128 * 128
        ft = min(F, max(128, ft))
    else:
        # TODO(synk): F <= 128 with an enormous non-128-multiple n_classes can
        # still overshoot the block target here; it only matters if the block
        # no longer fits under vmem_limit.
        ft = F
    nf = pl.cdiv(F, ft)

    out2d = pl.pallas_call(
        functools.partial(_gln_interleave_kernel, n_classes=C),
        out_shape=jax.ShapeDtypeStruct((B, F * C), out_dtype),
        grid=(nb, nf),
        in_specs=[pl.BlockSpec((tb, ft), lambda i, j: (i, j))],
        out_specs=pl.BlockSpec((tb, ft * C), lambda i, j: (i, j)),
        compiler_params=compiler_params,
    )(x)
    # Contiguous (free) reshape back to the PyTorch (B, F, n_classes) layout.
    return out2d.reshape(B, F, C)


if __name__ == "__main__":
    def ref_forward(xx, n_classes):
        return jax.nn.sigmoid(
            jnp.broadcast_to(xx[:, :, None], (*xx.shape, n_classes)))

    key = jax.random.PRNGKey(0)

    # 1) Small case consistent with the module: x (batch, features) -> (B, F, C).
    B, F, C = 2, 16, 8
    x = jax.random.normal(key, (B, F), dtype=jnp.float32)
    out = jax.block_until_ready(base_gln_forward(x, C))
    assert out.shape == (B, F, C) and out.dtype == jnp.float32
    assert jnp.allclose(out, ref_forward(x, C), atol=1e-5, rtol=1e-5)

    # 2) Row-tiled pipelined path with a partial edge block (forced tiny budget).
    x2 = jax.random.normal(jax.random.PRNGKey(1), (50, 16), dtype=jnp.float32)
    out2 = jax.block_until_ready(
        base_gln_forward(x2, 8, target_block_bytes=8 * 16 * 8 * 4))
    assert jnp.allclose(out2, ref_forward(x2, 8), atol=1e-5, rtol=1e-5)

    # 3) Column-tiled interleave path (wide feature axis, tiny budget).
    x3 = jax.random.normal(jax.random.PRNGKey(2), (16, 256), dtype=jnp.float32)
    out3 = jax.block_until_ready(
        base_gln_forward(x3, 8, target_block_bytes=8 * 128 * 8 * 4))
    assert jnp.allclose(out3, ref_forward(x3, 8), atol=1e-5, rtol=1e-5)

    # 4) Lane-dense class axis (C % 128 == 0): direct 3D path, class-tiled.
    x4 = jax.random.normal(jax.random.PRNGKey(3), (8, 16), dtype=jnp.float32)
    out4 = jax.block_until_ready(
        base_gln_forward(x4, 256, target_block_bytes=8 * 16 * 128 * 4))
    assert out4.shape == (8, 16, 256)
    assert jnp.allclose(out4, ref_forward(x4, 256), atol=1e-5, rtol=1e-5)

    # 5) bf16 output (the biggest bandwidth lever when the consumer allows it).
    out5 = jax.block_until_ready(base_gln_forward(x, C, out_dtype=jnp.bfloat16))
    assert out5.dtype == jnp.bfloat16
    assert jnp.allclose(out5.astype(jnp.float32), ref_forward(x, C),
                        atol=8e-3, rtol=8e-3)

    print("KERNEL_OK")
</pallas_src>

<mosaic_0001>
module attributes {stable_mosaic.version = 11 : i64} {
  func.func @_gln_interleave_kernel(%arg0: i32, %arg1: i32, %arg2: memref<2x16xf32, #tpu.memory_space<vmem>>, %arg3: memref<2x128xf32, #tpu.memory_space<vmem>>) attributes {dimension_semantics = [#tpu.dimension_semantics<parallel>, #tpu.dimension_semantics<parallel>], iteration_bounds = array<i64: 1, 1>, scalar_prefetch = 0 : i64, scratch_operands = 0 : i64, tpu.core_type = #tpu.core_type<tc>, window_params = [{transform_indices = @transform_0, window_bounds = array<i64: 2, 16>}, {transform_indices = @transform_1, window_bounds = array<i64: 2, 128>}]} {
    %c0 = arith.constant 0 : index
    %c0_0 = arith.constant 0 : index
    %0 = vector.load %arg2[%c0, %c0_0] : memref<2x16xf32, #tpu.memory_space<vmem>>, vector<2x16xf32>
    %cst = arith.constant 0.000000e+00 : f32
    %1 = vector.broadcast %cst : f32 to vector<2x16xf32>
    %2 = arith.subf %1, %0 : vector<2x16xf32>
    %3 = math.exp %2 : vector<2x16xf32>
    %cst_1 = arith.constant 1.000000e+00 : f32
    %4 = vector.broadcast %cst_1 : f32 to vector<2x16xf32>
    %5 = arith.addf %4, %3 : vector<2x16xf32>
    %cst_2 = arith.constant 1.000000e+00 : f32
    %6 = vector.broadcast %cst_2 : f32 to vector<2x16xf32>
    %7 = arith.divf %6, %5 : vector<2x16xf32>
    %8 = vector.shape_cast %7 : vector<2x16xf32> to vector<2x16x1xf32>
    %9 = vector.shape_cast %8 : vector<2x16x1xf32> to vector<2x16x1xf32>
    %10 = vector.broadcast %9 : vector<2x16x1xf32> to vector<2x16x8xf32>
    %11 = vector.shape_cast %10 : vector<2x16x8xf32> to vector<2x128xf32>
    %c0_3 = arith.constant 0 : index
    %c0_4 = arith.constant 0 : index
    %12 = vector.load %arg3[%c0_3, %c0_4] : memref<2x128xf32, #tpu.memory_space<vmem>>, vector<2x128xf32>
    tpu.vector_store %arg3[%c0_3, %c0_4], %11 {strides = array<i32>} : memref<2x128xf32, #tpu.memory_space<vmem>>, vector<2x128xf32>,
    return
  }
  func.func @transform_0(%arg0: i32, %arg1: i32) -> (i32, i32) {
    %c0_i32 = arith.constant 0 : i32
    return %arg0, %arg1 : i32, i32
  }
  func.func @transform_1(%arg0: i32, %arg1: i32) -> (i32, i32) {
    %c0_i32 = arith.constant 0 : i32
    return %arg0, %arg1 : i32, i32
  }
}

</mosaic_0001>

<llo_original>
// kernel: tpu_custom_call.1
$region0: #{tpu_custom_call.1}
  #allocation0 [shape = 'u32[]', space=smem, size = 0x4, offset = 0x4, fixed_abs, tag = 'smem constant byte address 0x4 - core index']
  #allocation1 [shape = 'u32[72,128]{1,0:T(1,128)}', space=vmem, size = 0x9000, scoped, tag = 'internal scratch']
  %s0 = inlined_call_operand.hbm [shape: f32[2,16], index: 0, kind: input, shape index: {}]
  %s1 = inlined_call_operand.hbm [shape: f32[2,128], index: 1, kind: output, shape index: {}]
  %s2 = sld [smem:[#allocation0]]
  $region18: #{tpu_custom_call.1} parent=0
    _
  %s4 = ssub.s32 1, %s2
  %s5 = scalar_select 0, %s4, %s2
  $region1: #{tpu_custom_call.1} parent=0
    #allocation2 [shape = 'u8[1024]{0}', space=vmem, size = 0x400, scoped, tag = 'input window, operand 0, single buffered']
    #allocation3 [shape = 's32[1]{0}', space=sflag, size = 0x4, scoped, tag = 'scoped memory for tpu_custom_call.1']
    #allocation4 [shape = 's32[1]{0}', space=sflag, size = 0x4, scoped, tag = 'scoped memory for tpu_custom_call.1']
    #allocation5 [shape = 'u8[1024]{0}', space=vmem, size = 0x400, scoped, tag = 'output window, operand 0, single buffered']
    %6 = vsyncpa [#allocation3], 0
    %7 = vsyncpa [#allocation4], 0
    // Predicated region
    $region2: #{tpu_custom_call.1} parent=1 // pred_check
      _
    $region3: #{tpu_custom_call.1} parent=1 // pred_check_branch
      %9 = sbr.rel (0) target = $region5
    $region4: #{tpu_custom_call.1} parent=1 // pred_region
      %11 = vsyncadd [#allocation3], 0
      %s13 = sshll.u32 %s0, 4
      %s14 = int_to_ptr.hbm [resolvable:$true] %s13
      %s15 = sshll.u32 [#allocation2], 4
      %s16 = int_to_ptr.vmem [resolvable:$true] %s15
      %18 = dma.hbm_to_vmem [thread:$0]  %s14, 32, %s16, [#allocation3]
    $region5: #{tpu_custom_call.1} parent=1 // pred_fallthru
      _
    // Predicated region
    $region6: #{tpu_custom_call.1} parent=1 // pred_check
      _
    $region7: #{tpu_custom_call.1} parent=1 // pred_check_branch
      %20 = sbr.rel (0) target = $region9
    $region8: #{tpu_custom_call.1} parent=1 // pred_region
      %22 = dma.done [#allocation3], 32
    $region9: #{tpu_custom_call.1} parent=1 // pred_fallthru
      _
    %v23 = vld [vmem:[#allocation2] sm:$0x3]
    %v24 = vsub.f32 0.0, %v23
    %v25 = vmul.f32 %v24, 1.442695
    %v26 = vpow.pop %v25
    %v27 = vadd.f32 %v26, 1.0
    %v28 = vrcp.pop %v27
    %v29 = vmul.f32 %v27, %v28
    %v30 = vsub.f32 1.0, %v29
    %v31 = vmul.f32 %v28, %v30
    %v32 = vadd.f32 %v28, %v31
    %vm33 = vweird.f32 %v27
    %vm34 = vweird.f32 %v28
    %vm35 = vmor %vm33, %vm34
    %v36 = vsel %vm35, %v28, %v32
    %v37 = vand.u32 2147483647, %v27
    %vm38 = vcmp.eq.f32.partialorder %v37, 8.507059e+37
    %v39 = vand.u32 %v27, 2147483648
    %v40 = vor.u32 1.1754944e-38, %v39
    %v41 = vsel %vm38, %v40, %v36
    %v42 = vmul.f32 1.0, %v41
    %v43 = vperm.slane %v42, 0
    %v44 = vlaneseq
    %v45 = vshrl.u32 %v44, 7
    %47 = vset.pattern.permute.xlu0 %v45
    %48 = vperm.xlu0 %47, %v43
    %v49 = vpop.permute.xlu0 %48
    %v50 = vlaneseq
    %v51 = vshrl.u32 %v50, 7
    %v52 = vadd.s32 %v51, 8
    %53 = vset.pattern.permute.xlu0 %v52
    %54 = vperm.xlu0 %53, %v43
    %v55 = vpop.permute.xlu0 %54
    %v56 = vperm.slane %v42, 1
    %v57 = vlaneseq
    %v58 = vshrl.u32 %v57, 7
    %60 = vset.pattern.permute.xlu0 %v58
    %61 = vperm.xlu0 %60, %v56
    %v62 = vpop.permute.xlu0 %61
    %v63 = vlaneseq
    %v64 = vshrl.u32 %v63, 7
    %v65 = vadd.s32 %v64, 8
    %66 = vset.pattern.permute.xlu0 %v65
    %67 = vperm.xlu0 %66, %v56
    %v68 = vpop.permute.xlu0 %67
    %v69 = vrot.slane %v49, 4
    %vm70 = vcmask 1047556
    %v71 = vsel %vm70, 0.0, %v69
    %v73 = vunpack.c.l.s4 1983009808
    %v74 = vunpack.c.0.s8 %v73
    %v75 = vperm.slane %v49, %v74
    %v77 = vunpack.c.l.s4 1983009808
    %v78 = vunpack.c.0.s8 %v77
    %v79 = vperm.slane %v71, %v78
    %v80 = vrot.slane %v62, 4
    %v81 = vsel %vm70, 0.0, %v80
    %v83 = vunpack.c.l.s4 1983009808
    %v84 = vunpack.c.0.s8 %v83
    %v85 = vperm.slane %v62, %v84
    %v87 = vunpack.c.l.s4 1983009808
    %v88 = vunpack.c.0.s8 %v87
    %v89 = vperm.slane %v81, %v88
    %v90 = vrot.slane %v85, 4
    %v91 = vsel %vm70, %v90, %v75
    %v92 = vrot.slane %v75, 4
    %v93 = vsel %vm70, %v85, %v92
    %v95 = vunpack.c.l.s4 1934713408
    %v96 = vunpack.c.0.s8 %v95
    %v97 = vperm.slane %v91, %v96
    %v99 = vunpack.c.l.s4 1934713408
    %v100 = vunpack.c.0.s8 %v99
    %v101 = vperm.slane %v93, %v100
    %v102 = vrot.slane %v89, 4
    %v103 = vsel %vm70, %v102, %v79
    %v104 = vrot.slane %v79, 4
    %v105 = vsel %vm70, %v89, %v104
    %v107 = vunpack.c.l.s4 1934713408
    %v108 = vunpack.c.0.s8 %v107
    %v109 = vperm.slane %v103, %v108
    %v111 = vunpack.c.l.s4 1934713408
    %v112 = vunpack.c.0.s8 %v111
    %v113 = vperm.slane %v105, %v112
    %v114 = vrot.slane %v97, 4
    %v115 = vsel %vm70, 0.0, %v114
    %v116 = vrot.slane %v101, 4
    %v117 = vsel %vm70, 0.0, %v116
    %v118 = vrot.slane %v109, 4
    %v119 = vsel %vm70, 0.0, %v118
    %v120 = vrot.slane %v113, 4
    %v121 = vsel %vm70, 0.0, %v120
    %v122 = vrot.slane %v55, 4
    %v123 = vsel %vm70, 0.0, %v122
    %v125 = vunpack.c.l.s4 1983009808
    %v126 = vunpack.c.0.s8 %v125
    %v127 = vperm.slane %v55, %v126
    %v129 = vunpack.c.l.s4 1983009808
    %v130 = vunpack.c.0.s8 %v129
    %v131 = vperm.slane %v123, %v130
    %v132 = vrot.slane %v68, 4
    %v133 = vsel %vm70, 0.0, %v132
    %v135 = vunpack.c.l.s4 1983009808
    %v136 = vunpack.c.0.s8 %v135
    %v137 = vperm.slane %v68, %v136
    %v139 = vunpack.c.l.s4 1983009808
    %v140 = vunpack.c.0.s8 %v139
    %v141 = vperm.slane %v133, %v140
    %v142 = vrot.slane %v137, 4
    %v143 = vsel %vm70, %v142, %v127
    %v144 = vrot.slane %v127, 4
    %v145 = vsel %vm70, %v137, %v144
    %v147 = vunpack.c.l.s4 1934713408
    %v148 = vunpack.c.0.s8 %v147
    %v149 = vperm.slane %v143, %v148
    %v151 = vunpack.c.l.s4 1934713408
    %v152 = vunpack.c.0.s8 %v151
    %v153 = vperm.slane %v145, %v152
    %v154 = vrot.slane %v141, 4
    %v155 = vsel %vm70, %v154, %v131
    %v156 = vrot.slane %v131, 4
    %v157 = vsel %vm70, %v141, %v156
    %v159 = vunpack.c.l.s4 1934713408
    %v160 = vunpack.c.0.s8 %v159
    %v161 = vperm.slane %v155, %v160
    %v163 = vunpack.c.l.s4 1934713408
    %v164 = vunpack.c.0.s8 %v163
    %v165 = vperm.slane %v157, %v164
    %v166 = vrot.slane %v149, 4
    %v167 = vsel %vm70, 0.0, %v166
    %v168 = vrot.slane %v153, 4
    %v169 = vsel %vm70, 0.0, %v168
    %v170 = vrot.slane %v161, 4
    %v171 = vsel %vm70, 0.0, %v170
    %v172 = vrot.slane %v165, 4
    %v173 = vsel %vm70, 0.0, %v172
    %175 = vrot.lane.b32.xlu0 %v115, 8
    %v176 = vpop.permute.xlu0 %175
    %179 = vrot.lane.b32.xlu0 %v101, 16
    %v180 = vpop.permute.xlu0 %179
    %183 = vrot.lane.b32.xlu0 %v117, 24
    %v184 = vpop.permute.xlu0 %183
    %187 = vrot.lane.b32.xlu0 %v109, 32
    %v188 = vpop.permute.xlu0 %187
    %191 = vrot.lane.b32.xlu0 %v119, 40
    %v192 = vpop.permute.xlu0 %191
    %195 = vrot.lane.b32.xlu0 %v113, 48
    %v196 = vpop.permute.xlu0 %195
    %199 = vrot.lane.b32.xlu0 %v121, 56
    %v200 = vpop.permute.xlu0 %199
    %203 = vrot.lane.b32.xlu0 %v149, 64
    %v204 = vpop.permute.xlu0 %203
    %207 = vrot.lane.b32.xlu0 %v167, 72
    %v208 = vpop.permute.xlu0 %207
    %211 = vrot.lane.b32.xlu0 %v153, 80
    %v212 = vpop.permute.xlu0 %211
    %215 = vrot.lane.b32.xlu0 %v169, 88
    %v216 = vpop.permute.xlu0 %215
    %219 = vrot.lane.b32.xlu0 %v161, 96
    %v220 = vpop.permute.xlu0 %219
    %223 = vrot.lane.b32.xlu0 %v171, 104
    %v224 = vpop.permute.xlu0 %223
    %227 = vrot.lane.b32.xlu0 %v165, 112
    %v228 = vpop.permute.xlu0 %227
    %231 = vrot.lane.b32.xlu0 %v173, 120
    %v232 = vpop.permute.xlu0 %231
    %vm234 = vcmask 64512
    %v235 = vsel %vm234, %v97, %v176
    %vm236 = vcmask 130048
    %v237 = vsel %vm236, %v235, %v180
    %vm238 = vcmask 195584
    %v239 = vsel %vm238, %v237, %v184
    %vm240 = vcmask 261120
    %v241 = vsel %vm240, %v239, %v188
    %vm242 = vcmask 326656
    %v243 = vsel %vm242, %v241, %v192
    %vm244 = vcmask 392192
    %v245 = vsel %vm244, %v243, %v196
    %vm246 = vcmask 457728
    %v247 = vsel %vm246, %v245, %v200
    %vm248 = vcmask 523264
    %v249 = vsel %vm248, %v247, %v204
    %vm250 = vcmask 588800
    %v251 = vsel %vm250, %v249, %v208
    %vm252 = vcmask 654336
    %v253 = vsel %vm252, %v251, %v212
    %vm254 = vcmask 719872
    %v255 = vsel %vm254, %v253, %v216
    %vm256 = vcmask 785408
    %v257 = vsel %vm256, %v255, %v220
    %vm258 = vcmask 850944
    %v259 = vsel %vm258, %v257, %v224
    %vm260 = vcmask 916480
    %v261 = vsel %vm260, %v259, %v228
    %vm262 = vcmask 982016
    %v263 = vsel %vm262, %v261, %v232
    %264 = vst [vmem:[#allocation5] sm:$0x3] %v263
    // Predicated region
    $region10: #{tpu_custom_call.1} parent=1 // pred_check
      _
    $region11: #{tpu_custom_call.1} parent=1 // pred_check_branch
      %266 = sbr.rel (0) target = $region13
    $region12: #{tpu_custom_call.1} parent=1 // pred_region
      %268 = vsyncadd [#allocation4], 0
      %s270 = sshll.u32 [#allocation5], 4
      %s271 = int_to_ptr.vmem [resolvable:$true] %s270
      %s272 = sshll.u32 %s1, 4
      %s273 = int_to_ptr.hbm [resolvable:$true] %s272
      %275 = dma.vmem_to_hbm [thread:$0]  %s271, 32, %s273, [#allocation4]
    $region13: #{tpu_custom_call.1} parent=1 // pred_fallthru
      _
    // Predicated region
    $region14: #{tpu_custom_call.1} parent=1 // pred_check
      _
    $region15: #{tpu_custom_call.1} parent=1 // pred_check_branch
      %277 = sbr.rel (0) target = $region17
    $region16: #{tpu_custom_call.1} parent=1 // pred_region
      %279 = dma.done [#allocation4], 32
    $region17: #{tpu_custom_call.1} parent=1 // pred_fallthru
      _
    %280 = vsyncpa [#allocation3], 1
    %281 = vsyncpa [#allocation4], 1

</llo_original>
